<compile_context>
chip_gen: v7x
topology: tpu7x:2x2x1
jax: 0.10.0
libtpu: 0.0.40
codegen_flags: <defaults>
</compile_context>

<pallas_src>
import functools

import jax
import jax.numpy as jnp
from jax.experimental import pallas as pl
from jax.experimental.pallas import tpu as pltpu


# Below this total operand+output footprint (bytes) the gridless path is used.
_SIMPLE_PATH_BYTES = 4 * 1024 * 1024


def _apply_activation(y, activation):
    if activation == "sigmoid":
        return jax.nn.sigmoid(y)
    if activation == "tanh":
        return jnp.tanh(y)
    if activation == "relu":
        return jnp.maximum(y, 0.0)
    if activation in ("leaky_relu", "elu"):
        raise ValueError(f"{activation} is not supported by GAP9")
    return y  # None / 'linear' -> identity


def _fc_decoder_kernel(x_ref, w_ref, b_ref, o_ref, *, activation):
    # MXU matmul with f32 accumulation, VPU bias add, EUP transcendental activation.
    y = jnp.dot(x_ref[...], w_ref[...], preferred_element_type=jnp.float32)
    y = y + b_ref[...]                       # (1, O) broadcasts over (TM, O)
    y = _apply_activation(y, activation)
    o_ref[...] = y.astype(o_ref.dtype)


def _cost_estimate(B, L, O, activation, itemsize):
    flops = 2 * B * L * O + B * O            # matmul + bias add
    transcendentals = B * O if activation in ("sigmoid", "tanh") else 0
    bytes_accessed = (B * L + L * O + O + B * O) * itemsize
    return pl.CostEstimate(flops=flops,
                           transcendentals=transcendentals,
                           bytes_accessed=bytes_accessed)


def fc_decoder(x, w_t, b, activation=None, *, tm=512, use_grid=None):
    """x: (B, L), w_t: (L, O) = PyTorch weight transposed, b: (O,)."""
    B, L = x.shape
    L2, O = w_t.shape
    assert L == L2, (L, L2)
    b2d = b.reshape(1, O)

    kernel = functools.partial(_fc_decoder_kernel, activation=activation)
    cost = _cost_estimate(B, L, O, activation, x.dtype.itemsize)
    footprint = (B * L + L * O + O + B * O) * x.dtype.itemsize

    if use_grid is None:
        use_grid = footprint > _SIMPLE_PATH_BYTES

    if not use_grid:
        # ---- Small-problem path: no grid, operands whole in VMEM, no pipelining. ----
        return pl.pallas_call(
            kernel,
            out_shape=jax.ShapeDtypeStruct((B, O), x.dtype),
            in_specs=[
                pl.BlockSpec(memory_space=pltpu.MemorySpace.VMEM),
                pl.BlockSpec(memory_space=pltpu.MemorySpace.VMEM),
                pl.BlockSpec(memory_space=pltpu.MemorySpace.VMEM),
            ],
            out_specs=pl.BlockSpec(memory_space=pltpu.MemorySpace.VMEM),
            cost_estimate=cost,
        )(x, w_t, b2d)

    # ---- Large-batch path: tile the batch, keep weight/bias resident in VMEM. ----
    tm = max(8, min(tm, B))
    tm = (tm // 8) * 8                       # f32 sublane multiple
    grid = (pl.cdiv(B, tm),)
    return pl.pallas_call(
        kernel,
        out_shape=jax.ShapeDtypeStruct((B, O), x.dtype),
        grid_spec=pl.GridSpec(
            grid=grid,
            in_specs=[
                pl.BlockSpec((tm, L), lambda i: (i, 0)),   # x tile marches over batch
                pl.BlockSpec((L, O), lambda i: (0, 0)),    # weight: same block every step
                pl.BlockSpec((1, O), lambda i: (0, 0)),    # bias:   same block every step
            ],
            out_specs=pl.BlockSpec((tm, O), lambda i: (i, 0)),
        ),
        compiler_params=pltpu.CompilerParams(
            dimension_semantics=("parallel",),             # megacore split on v7x
        ),
        cost_estimate=cost,
    )(x, w_t, b2d)


def _ref_fc_decoder(x, w_t, b, activation=None):
    y = jnp.dot(x, w_t, preferred_element_type=jnp.float32) + b
    return _apply_activation(y, activation)


if __name__ == "__main__":
    # Module config: FcDecoder(output_dim=128, latent_dim=32, activation='sigmoid')
    latent_dim = 32
    output_dim = 128

    key = jax.random.PRNGKey(0)
    kx, kw, kb = jax.random.split(key, 3)

    # Deterministic synthetic parameters (PyTorch Linear-style uniform bound 1/sqrt(fan_in)).
    bound = 1.0 / (latent_dim ** 0.5)
    w_pt = jax.random.uniform(kw, (output_dim, latent_dim), jnp.float32, -bound, bound)
    b = jax.random.uniform(kb, (output_dim,), jnp.float32, -bound, bound)
    w_t = w_pt.T  # (latent_dim, output_dim) kernel layout

    # 1) Small-batch (gridless VMEM) path — the typical FcDecoder call.
    batch = 8
    x = jax.random.normal(kx, (batch, latent_dim), jnp.float32)
    for act in ("sigmoid", "tanh", "relu", "linear", None):
        out = jax.block_until_ready(fc_decoder(x, w_t, b, activation=act))
        ref = _ref_fc_decoder(x, w_t, b, activation=act)
        assert out.shape == (batch, output_dim)
        assert jnp.allclose(out, ref, atol=1e-5, rtol=1e-5), f"mismatch ({act}, small path)"

    # 2) Batch-tiled path (stacked decodes filling the MXU M dimension; weight resident).
    big_batch = 1024
    xb = jax.random.normal(jax.random.PRNGKey(1), (big_batch, latent_dim), jnp.float32)
    out_b = jax.block_until_ready(
        fc_decoder(xb, w_t, b, activation="sigmoid", tm=512, use_grid=True))
    ref_b = _ref_fc_decoder(xb, w_t, b, activation="sigmoid")
    assert out_b.shape == (big_batch, output_dim)
    assert jnp.allclose(out_b, ref_b, atol=1e-5, rtol=1e-5), "mismatch (tiled path)"

    # TODO(synk): for repeated per-token decoding, fold many invocations into one
    # pallas_call grid (as the tiled path does) so the 16 KiB weight is DMA'd only once.
    print("KERNEL_OK")
</pallas_src>

<mosaic_0001>
module attributes {stable_mosaic.version = 11 : i64} {
  func.func @_fc_decoder_kernel(%arg0: memref<8x32xf32, #tpu.memory_space<vmem>>, %arg1: memref<32x128xf32, #tpu.memory_space<vmem>>, %arg2: memref<1x128xf32, #tpu.memory_space<vmem>>, %arg3: memref<8x128xf32, #tpu.memory_space<vmem>>) attributes {dimension_semantics = [], scalar_prefetch = 0 : i64, scratch_operands = 0 : i64, tpu.core_type = #tpu.core_type<tc>} {
    %c0 = arith.constant 0 : index
    %c0_0 = arith.constant 0 : index
    %0 = vector.load %arg0[%c0, %c0_0] : memref<8x32xf32, #tpu.memory_space<vmem>>, vector<8x32xf32>
    %c0_1 = arith.constant 0 : index
    %c0_2 = arith.constant 0 : index
    %1 = vector.load %arg1[%c0_1, %c0_2] : memref<32x128xf32, #tpu.memory_space<vmem>>, vector<32x128xf32>
    %cst = arith.constant dense<0.000000e+00> : vector<8x128xf32>
    %2 = tpu.matmul %0, %1, %cst {dimension_numbers = #tpu.dot_dimension_numbers<[1], [0], [0], [1], [0, 0, 1, 1], [], []>} : vector<8x32xf32>, vector<32x128xf32>, vector<8x128xf32> -> vector<8x128xf32>
    %c0_3 = arith.constant 0 : index
    %c0_4 = arith.constant 0 : index
    %3 = vector.load %arg2[%c0_3, %c0_4] : memref<1x128xf32, #tpu.memory_space<vmem>>, vector<1x128xf32>
    %4 = vector.broadcast %3 : vector<1x128xf32> to vector<8x128xf32>
    %5 = arith.addf %2, %4 : vector<8x128xf32>
    %6 = arith.negf %5 : vector<8x128xf32>
    %7 = math.exp %6 : vector<8x128xf32>
    %cst_5 = arith.constant 1.000000e+00 : f32
    %8 = vector.broadcast %cst_5 : f32 to vector<8x128xf32>
    %9 = arith.addf %8, %7 : vector<8x128xf32>
    %10 = arith.divf %8, %9 : vector<8x128xf32>
    %c0_6 = arith.constant 0 : index
    %c0_7 = arith.constant 0 : index
    %11 = vector.load %arg3[%c0_6, %c0_7] : memref<8x128xf32, #tpu.memory_space<vmem>>, vector<8x128xf32>
    tpu.vector_store %arg3[%c0_6, %c0_7], %10 {strides = array<i32>} : memref<8x128xf32, #tpu.memory_space<vmem>>, vector<8x128xf32>,
    return
  }
}

</mosaic_0001>

<llo_original>
// kernel: tpu_custom_call.1
$region0: #{tpu_custom_call.1}
  #allocation0 [shape = 'u32[]', space=smem, size = 0x4, offset = 0x4, fixed_abs, tag = 'smem constant byte address 0x4 - core index']
  #allocation1 [shape = 'u32[144,128]{1,0:T(1,128)}', space=vmem, size = 0x12000, scoped, tag = 'internal scratch']
  %s0 = inlined_call_operand.hbm [shape: f32[8,32], index: 0, kind: input, shape index: {}]
  %s1 = inlined_call_operand.hbm [shape: f32[32,128], index: 1, kind: input, shape index: {}]
  %s2 = inlined_call_operand.vmem [shape: f32[1,128], index: 2, kind: input, shape index: {}]
  %s3 = inlined_call_operand.hbm [shape: f32[8,128], index: 3, kind: output, shape index: {}]
  %s4 = sld [smem:[#allocation0]]
  $region30: #{tpu_custom_call.1} parent=0
    _
  %s6 = ssub.s32 1, %s4
  %s7 = scalar_select 0, %s6, %s4
  $region1: #{tpu_custom_call.1} parent=0
    #allocation2 [shape = 'u8[4096]{0}', space=vmem, size = 0x1000, scoped, tag = 'input window, operand 0, single buffered']
    #allocation3 [shape = 's32[1]{0}', space=sflag, size = 0x4, scoped, tag = 'scoped memory for tpu_custom_call.1']
    #allocation4 [shape = 's32[1]{0}', space=sflag, size = 0x4, scoped, tag = 'scoped memory for tpu_custom_call.1']
    #allocation5 [shape = 'u8[16384]{0}', space=vmem, size = 0x4000, scoped, tag = 'input window, operand 1, single buffered']
    #allocation6 [shape = 's32[1]{0}', space=sflag, size = 0x4, scoped, tag = 'scoped memory for tpu_custom_call.1']
    #allocation7 [shape = 'u8[4096]{0}', space=vmem, size = 0x1000, scoped, tag = 'output window, operand 0, single buffered']
    %8 = vsyncpa [#allocation3], 0
    %9 = vsyncpa [#allocation6], 0
    %10 = vsyncpa [#allocation4], 0
    // Predicated region
    $region2: #{tpu_custom_call.1} parent=1 // pred_check
      _
    $region3: #{tpu_custom_call.1} parent=1 // pred_check_branch
      %12 = sbr.rel (0) target = $region5
    $region4: #{tpu_custom_call.1} parent=1 // pred_region
      %s14 = ssub.s32 128, 128
      %15 = vsyncadd [#allocation3], %s14
      %s17 = sshll.u32 [#allocation2], 4
      %s18 = int_to_ptr.vmem [resolvable:$true] %s17
      %20 = dma.hbm_to_vmem [thread:$0]  %s0, 128, %s18, [#allocation3]
    $region5: #{tpu_custom_call.1} parent=1 // pred_fallthru
      _
    // Predicated region
    $region6: #{tpu_custom_call.1} parent=1 // pred_check
      _
    $region7: #{tpu_custom_call.1} parent=1 // pred_check_branch
      %22 = sbr.rel (0) target = $region9
    $region8: #{tpu_custom_call.1} parent=1 // pred_region
      %s24 = ssub.s32 512, 512
      %25 = vsyncadd [#allocation6], %s24
      %s26 = sshll.u32 [#allocation5], 4
      %s27 = int_to_ptr.vmem [resolvable:$true] %s26
      %32 = dma.hbm_to_vmem [thread:$0]  %s1, 512, %s27, [#allocation6], 128, 128, 8
    $region9: #{tpu_custom_call.1} parent=1 // pred_fallthru
      _
    // Predicated region
    $region10: #{tpu_custom_call.1} parent=1 // pred_check
      _
    $region11: #{tpu_custom_call.1} parent=1 // pred_check_branch
      %34 = sbr.rel (0) target = $region13
    $region12: #{tpu_custom_call.1} parent=1 // pred_region
      _
    $region13: #{tpu_custom_call.1} parent=1 // pred_fallthru
      _
    // Predicated region
    $region14: #{tpu_custom_call.1} parent=1 // pred_check
      _
    $region15: #{tpu_custom_call.1} parent=1 // pred_check_branch
      %36 = sbr.rel (0) target = $region17
    $region16: #{tpu_custom_call.1} parent=1 // pred_region
      %37 = dma.done [#allocation3], 128
    $region17: #{tpu_custom_call.1} parent=1 // pred_fallthru
      _
    // Predicated region
    $region18: #{tpu_custom_call.1} parent=1 // pred_check
      _
    $region19: #{tpu_custom_call.1} parent=1 // pred_check_branch
      %39 = sbr.rel (0) target = $region21
    $region20: #{tpu_custom_call.1} parent=1 // pred_region
      %40 = dma.done [#allocation6], 512
    $region21: #{tpu_custom_call.1} parent=1 // pred_fallthru
      _
    %v41 = vld [vmem:[#allocation2] sm:$0xff]
    %v42 = vld [vmem:[#allocation5] sm:$0xff]
    %v43 = vld [vmem:[#allocation5 + $0x8] sm:$0xff]
    %v44 = vld [vmem:[#allocation5 + $0x10] sm:$0xff]
    %v45 = vld [vmem:[#allocation5 + $0x18] sm:$0xff]
    %v46 = vld [vmem:[%s2] sm:$0x1]
    %v48 = vlaneseq
    %v49 = vshrl.u32 %v48, 7
    %v50 = vsub.s32 0, %v49
    %v51 = vrot.slane %v46, %v50
    %vm53 = vcmask 261120
    %v55 = vsel %vm53, %v41, 0
    %57 = vmatprep.subr.mxu0 0.0
    %58 = vmatpush1.msra.mxu0 %v42
    %59 = vmatprep.subr.mxu0 0.0
    %60 = vmatpush1.msra.mxu0 %v43
    %61 = vmatprep.subr.mxu0 0.0
    %62 = vmatpush1.msra.mxu0 %v44
    %63 = vmatprep.subr.mxu0 0.0
    %64 = vmatpush1.msra.mxu0 %v45
    %65 = vmatprep.subr.mxu0 0.0
    %66 = vmatpush1.msra.mxu0 0.0
    %67 = vmatprep.subr.mxu0 0.0
    %68 = vmatpush1.msra.mxu0 0.0
    %69 = vmatprep.subr.mxu0 0.0
    %70 = vmatpush1.msra.mxu0 0.0
    %71 = vmatprep.subr.mxu0 0.0
    %72 = vmatpush1.msra.mxu0 0.0
    %73 = vmatprep.subr.mxu0 0.0
    %74 = vmatpush1.msra.mxu0 0.0
    %75 = vmatprep.subr.mxu0 0.0
    %76 = vmatpush1.msra.mxu0 0.0
    %77 = vmatprep.subr.mxu0 0.0
    %78 = vmatpush1.msra.mxu0 0.0
    %79 = vmatprep.subr.mxu0 0.0
    %80 = vmatpush1.msra.mxu0 0.0
    %81 = vmatprep.subr.mxu0 0.0
    %82 = vmatpush1.msra.mxu0 0.0
    %83 = vmatprep.subr.mxu0 0.0
    %84 = vmatpush1.msra.mxu0 0.0
    %85 = vmatprep.subr.mxu0 0.0
    %86 = vmatpush1.msra.mxu0 0.0
    %87 = vmatprep.subr.mxu0 0.0
    %88 = vmatpush1.msra.mxu0 0.0
    %89 = vmatprep.subr.mxu0 0.0
    %90 = vmatpush1.msra.mxu0 0.0
    %91 = vmatprep.subr.mxu0 0.0
    %92 = vmatpush1.msra.mxu0 0.0
    %93 = vmatprep.subr.mxu0 0.0
    %94 = vmatpush1.msra.mxu0 0.0
    %95 = vmatprep.subr.mxu0 0.0
    %96 = vmatpush1.msra.mxu0 0.0
    %97 = vmatprep.subr.mxu0 0.0
    %98 = vmatpush1.msra.mxu0 0.0
    %99 = vmatprep.subr.mxu0 0.0
    %100 = vmatpush1.msra.mxu0 0.0
    %101 = vmatprep.subr.mxu0 0.0
    %102 = vmatpush1.msra.mxu0 0.0
    %103 = vmatprep.subr.mxu0 0.0
    %104 = vmatpush1.msra.mxu0 0.0
    %105 = vmatprep.subr.mxu0 0.0
    %106 = vmatpush1.msra.mxu0 0.0
    %107 = vmatprep.subr.mxu0 0.0
    %108 = vmatpush1.msra.mxu0 0.0
    %109 = vmatprep.subr.mxu0 0.0
    %110 = vmatpush1.msra.mxu0 0.0
    %111 = vmatprep.subr.mxu0 0.0
    %112 = vmatpush1.msra.mxu0 0.0
    %113 = vmatprep.subr.mxu0 0.0
    %114 = vmatpush1.msra.mxu0 0.0
    %115 = vmatprep.subr.mxu0 0.0
    %116 = vmatpush1.msra.mxu0 0.0
    %117 = vmatprep.subr.mxu0 0.0
    %118 = vmatpush1.msra.mxu0 0.0
    %119 = vmatprep.subr.mxu0 0.0
    %120 = vmatpush1.msra.mxu0 0.0
    %121 = vmatprep.mubr.f32.mxu0 0.0
    %122 = vmatmul.mubr.f32.gmra.mrb[0].mxu0 %v55
    %v123 = vpop.f32.mrb[0].mxu0
    %v124 = vadd.f32 %v51, %v123
    %v125 = vpop.f32.mrb[0].mxu0
    %126 = vdwg.mxu0
    %v127 = vxor.u32 %v124, 2147483648
    %v128 = vmul.f32 %v127, 1.442695
    %v129 = vpow.pop %v128
    %v130 = vadd.f32 %v129, 1.0
    %v131 = vrcp.pop %v130
    %v132 = vmul.f32 1.0, %v131
    %133 = vst [vmem:[#allocation7] sm:$0xff] %v132
    // Predicated region
    $region22: #{tpu_custom_call.1} parent=1 // pred_check
      _
    $region23: #{tpu_custom_call.1} parent=1 // pred_check_branch
      %135 = sbr.rel (0) target = $region25
    $region24: #{tpu_custom_call.1} parent=1 // pred_region
      %s137 = ssub.s32 128, 128
      %138 = vsyncadd [#allocation4], %s137
      %s140 = sshll.u32 [#allocation7], 4
      %s141 = int_to_ptr.vmem [resolvable:$true] %s140
      %143 = dma.vmem_to_hbm [thread:$0]  %s141, 128, %s3, [#allocation4]
    $region25: #{tpu_custom_call.1} parent=1 // pred_fallthru
      _
    // Predicated region
    $region26: #{tpu_custom_call.1} parent=1 // pred_check
      _
    $region27: #{tpu_custom_call.1} parent=1 // pred_check_branch
      %145 = sbr.rel (0) target = $region29
    $region28: #{tpu_custom_call.1} parent=1 // pred_region
      %146 = dma.done [#allocation4], 128
    $region29: #{tpu_custom_call.1} parent=1 // pred_fallthru
      _
    %147 = vsyncpa [#allocation3], 1
    %148 = vsyncpa [#allocation6], 1
    %149 = vsyncpa [#allocation4], 1

</llo_original>
